<compile_context>
chip_gen: v7x
topology: tpu7x:2x2x1
jax: 0.10.0
libtpu: 0.0.40
codegen_flags: <defaults>
</compile_context>

<pallas_src>
import jax
import jax.numpy as jnp
from jax.experimental import pallas as pl
from jax.experimental.pallas import tpu as pltpu


def motion_encoder_kernel(x_ref, w_emb_t_ref, b_emb_ref, w_ih_t_ref, w_hh_t_ref, b_ref,
                          out_ref):
    # x_ref: (T*B, D) flattened time-major inputs; out_ref: (T, B, H)
    T, B, H = out_ref.shape

    # --- Hoisted input path (independent of h, so off the recurrence critical path) ---
    # spatial_embedding: Linear(input_dim -> embedding_dim), for all T*B rows at once.
    e = (jnp.dot(x_ref[...], w_emb_t_ref[...], preferred_element_type=jnp.float32)
         + b_emb_ref[...])                                        # (T*B, E)
    # Input-to-hidden projection + folded biases (b_ih + b_hh), for all timesteps.
    x_proj = (jnp.dot(e, w_ih_t_ref[...], preferred_element_type=jnp.float32)
              + b_ref[...])                                       # (T*B, 4H)

    w_hh_t = w_hh_t_ref[...]                                      # (H, 4H), loaded once

    # --- Serial LSTM recurrence, fully unrolled (T is small & static) ---
    h = jnp.zeros((B, H), jnp.float32)
    c = jnp.zeros((B, H), jnp.float32)
    for t in range(T):
        gates = (x_proj[t * B:(t + 1) * B, :]
                 + jnp.dot(h, w_hh_t, preferred_element_type=jnp.float32))   # (B, 4H)

        # Full-vreg transcendental passes, then static lane slices (PyTorch order i,f,g,o).
        sig = jax.nn.sigmoid(gates)
        tnh = jnp.tanh(gates)
        i_g = sig[:, 0 * H:1 * H]
        f_g = sig[:, 1 * H:2 * H]
        g_g = tnh[:, 2 * H:3 * H]
        o_g = sig[:, 3 * H:4 * H]

        c = f_g * c + i_g * g_g
        h = o_g * jnp.tanh(c)

        out_ref[t] = h                                            # VMEM store; one DMA at end


def motion_encoder(obs_traj, params):
    """obs_traj: (T, B, D) float32. Returns (output (T,B,H), final_h (1,B,H))."""
    T, B, D = obs_traj.shape
    E = params["w_emb"].shape[0]
    H = params["w_hh"].shape[1]

    # Glue (layout plumbing only): flatten time into rows, pre-transpose weights so the
    # kernel does plain (M,K)x(K,N) matmuls, and fold the two LSTM biases together.
    x2d = obs_traj.reshape(T * B, D)                  # (T*B, D), free reshape
    w_emb_t = params["w_emb"].T                       # (D, E)
    b_emb = params["b_emb"].reshape(1, E)             # (1, E)
    w_ih_t = params["w_ih"].T                         # (E, 4H)
    w_hh_t = params["w_hh"].T                         # (H, 4H)
    b = (params["b_ih"] + params["b_hh"]).reshape(1, 4 * H)

    grid_spec = pltpu.PrefetchScalarGridSpec(
        num_scalar_prefetch=0,
        grid=(1,),                                    # single invocation; everything VMEM-resident
        in_specs=[
            pl.BlockSpec((T * B, D), lambda i: (0, 0)),
            pl.BlockSpec((D, E), lambda i: (0, 0)),
            pl.BlockSpec((1, E), lambda i: (0, 0)),
            pl.BlockSpec((E, 4 * H), lambda i: (0, 0)),
            pl.BlockSpec((H, 4 * H), lambda i: (0, 0)),
            pl.BlockSpec((1, 4 * H), lambda i: (0, 0)),
        ],
        out_specs=pl.BlockSpec((T, B, H), lambda i: (0, 0, 0)),
    )

    output = pl.pallas_call(
        motion_encoder_kernel,
        out_shape=jax.ShapeDtypeStruct((T, B, H), jnp.float32),
        grid_spec=grid_spec,
        compiler_params=pltpu.CompilerParams(
            dimension_semantics=("arbitrary",)),
    )(x2d, w_emb_t, b_emb, w_ih_t, w_hh_t, b)

    final_h = output[T - 1:T]                         # (1, B, H); free slice in the wrapper
    return output, final_h


def motion_encoder_reference(obs_traj, params):
    """Pure-JAX reference mirroring nn.Linear + nn.LSTM (gate order i,f,g,o)."""
    T, B, _ = obs_traj.shape
    H = params["w_hh"].shape[1]
    e = obs_traj @ params["w_emb"].T + params["b_emb"]
    h = jnp.zeros((B, H), jnp.float32)
    c = jnp.zeros((B, H), jnp.float32)
    outs = []
    for t in range(T):
        gates = (e[t] @ params["w_ih"].T + params["b_ih"]
                 + h @ params["w_hh"].T + params["b_hh"])
        i = jax.nn.sigmoid(gates[:, :H])
        f = jax.nn.sigmoid(gates[:, H:2 * H])
        g = jnp.tanh(gates[:, 2 * H:3 * H])
        o = jax.nn.sigmoid(gates[:, 3 * H:])
        c = f * c + i * g
        h = o * jnp.tanh(c)
        outs.append(h)
    return jnp.stack(outs), h[None]


def init_params(key, input_dim, embedding_dim, hidden_dim):
    """Deterministic synthetic params, PyTorch-style shapes & uniform(-1/sqrt(fan), ...) init."""
    ks = jax.random.split(key, 6)

    def unif(k, shape, fan):
        bound = 1.0 / jnp.sqrt(fan)
        return jax.random.uniform(k, shape, jnp.float32, -bound, bound)

    return {
        "w_emb": unif(ks[0], (embedding_dim, input_dim), input_dim),
        "b_emb": unif(ks[1], (embedding_dim,), input_dim),
        "w_ih": unif(ks[2], (4 * hidden_dim, embedding_dim), hidden_dim),
        "w_hh": unif(ks[3], (4 * hidden_dim, hidden_dim), hidden_dim),
        "b_ih": unif(ks[4], (4 * hidden_dim,), hidden_dim),
        "b_hh": unif(ks[5], (4 * hidden_dim,), hidden_dim),
    }


if __name__ == "__main__":
    # Config implied by the module: rnn_type="LSTM", batch_first=False,
    # in_features=2, embedding_dim=16, encoder_h_dim=32.
    OBS_LEN, BATCH, INPUT_DIM = 8, 8, 2
    EMBEDDING_DIM, ENCODER_H_DIM = 16, 32

    key = jax.random.PRNGKey(0)
    k_x, k_p = jax.random.split(key)
    obs_traj = jax.random.normal(k_x, (OBS_LEN, BATCH, INPUT_DIM), jnp.float32)
    params = init_params(k_p, INPUT_DIM, EMBEDDING_DIM, ENCODER_H_DIM)

    output, final_h = motion_encoder(obs_traj, params)
    output = jax.block_until_ready(output)
    final_h = jax.block_until_ready(final_h)

    ref_out, ref_final_h = motion_encoder_reference(obs_traj, params)

    assert output.shape == (OBS_LEN, BATCH, ENCODER_H_DIM)
    assert final_h.shape == (1, BATCH, ENCODER_H_DIM)
    assert jnp.allclose(output, ref_out, atol=1e-3, rtol=1e-3)
    assert jnp.allclose(final_h, ref_final_h, atol=1e-3, rtol=1e-3)

    print("KERNEL_OK")
</pallas_src>

<mosaic_0001>
module attributes {stable_mosaic.version = 11 : i64} {
  func.func @motion_encoder_kernel(%arg0: i32, %arg1: memref<64x2xf32, #tpu.memory_space<vmem>>, %arg2: memref<2x16xf32, #tpu.memory_space<vmem>>, %arg3: memref<1x16xf32, #tpu.memory_space<vmem>>, %arg4: memref<16x128xf32, #tpu.memory_space<vmem>>, %arg5: memref<32x128xf32, #tpu.memory_space<vmem>>, %arg6: memref<1x128xf32, #tpu.memory_space<vmem>>, %arg7: memref<8x8x32xf32, #tpu.memory_space<vmem>>) attributes {dimension_semantics = [#tpu.dimension_semantics<arbitrary>], iteration_bounds = array<i64: 1>, scalar_prefetch = 0 : i64, scratch_operands = 0 : i64, tpu.core_type = #tpu.core_type<tc>, window_params = [{pipeline_mode = #tpu.pipeline_mode<synchronous>, transform_indices = @transform_0, window_bounds = array<i64: 64, 2>}, {pipeline_mode = #tpu.pipeline_mode<synchronous>, transform_indices = @transform_1, window_bounds = array<i64: 2, 16>}, {pipeline_mode = #tpu.pipeline_mode<synchronous>, transform_indices = @transform_2, window_bounds = array<i64: 1, 16>}, {pipeline_mode = #tpu.pipeline_mode<synchronous>, transform_indices = @transform_3, window_bounds = array<i64: 16, 128>}, {pipeline_mode = #tpu.pipeline_mode<synchronous>, transform_indices = @transform_4, window_bounds = array<i64: 32, 128>}, {pipeline_mode = #tpu.pipeline_mode<synchronous>, transform_indices = @transform_5, window_bounds = array<i64: 1, 128>}, {pipeline_mode = #tpu.pipeline_mode<synchronous>, transform_indices = @transform_6, window_bounds = array<i64: 8, 8, 32>}]} {
    %c0 = arith.constant 0 : index
    %c0_0 = arith.constant 0 : index
    %0 = vector.load %arg1[%c0, %c0_0] : memref<64x2xf32, #tpu.memory_space<vmem>>, vector<64x2xf32>
    %c0_1 = arith.constant 0 : index
    %c0_2 = arith.constant 0 : index
    %1 = vector.load %arg2[%c0_1, %c0_2] : memref<2x16xf32, #tpu.memory_space<vmem>>, vector<2x16xf32>
    %cst = arith.constant dense<0.000000e+00> : vector<64x16xf32>
    %2 = tpu.matmul %0, %1, %cst {dimension_numbers = #tpu.dot_dimension_numbers<[1], [0], [0], [1], [0, 0, 1, 1], [], []>} : vector<64x2xf32>, vector<2x16xf32>, vector<64x16xf32> -> vector<64x16xf32>
    %c0_3 = arith.constant 0 : index
    %c0_4 = arith.constant 0 : index
    %3 = vector.load %arg3[%c0_3, %c0_4] : memref<1x16xf32, #tpu.memory_space<vmem>>, vector<1x16xf32>
    %4 = vector.broadcast %3 : vector<1x16xf32> to vector<64x16xf32>
    %5 = arith.addf %2, %4 : vector<64x16xf32>
    %c0_5 = arith.constant 0 : index
    %c0_6 = arith.constant 0 : index
    %6 = vector.load %arg4[%c0_5, %c0_6] : memref<16x128xf32, #tpu.memory_space<vmem>>, vector<16x128xf32>
    %cst_7 = arith.constant dense<0.000000e+00> : vector<64x128xf32>
    %7 = tpu.matmul %5, %6, %cst_7 {dimension_numbers = #tpu.dot_dimension_numbers<[1], [0], [0], [1], [0, 0, 1, 1], [], []>} : vector<64x16xf32>, vector<16x128xf32>, vector<64x128xf32> -> vector<64x128xf32>
    %c0_8 = arith.constant 0 : index
    %c0_9 = arith.constant 0 : index
    %8 = vector.load %arg6[%c0_8, %c0_9] : memref<1x128xf32, #tpu.memory_space<vmem>>, vector<1x128xf32>
    %9 = vector.broadcast %8 : vector<1x128xf32> to vector<64x128xf32>
    %10 = arith.addf %7, %9 : vector<64x128xf32>
    %c0_10 = arith.constant 0 : index
    %c0_11 = arith.constant 0 : index
    %11 = vector.load %arg5[%c0_10, %c0_11] : memref<32x128xf32, #tpu.memory_space<vmem>>, vector<32x128xf32>
    %cst_12 = arith.constant 0.000000e+00 : f32
    %12 = vector.broadcast %cst_12 : f32 to vector<8x32xf32>
    %cst_13 = arith.constant 0.000000e+00 : f32
    %13 = vector.broadcast %cst_13 : f32 to vector<8x32xf32>
    %14 = vector.extract_strided_slice %10 {offsets = [0, 0], sizes = [8, 128], strides = [1, 1]} : vector<64x128xf32> to vector<8x128xf32>
    %cst_14 = arith.constant dense<0.000000e+00> : vector<8x128xf32>
    %15 = tpu.matmul %12, %11, %cst_14 {dimension_numbers = #tpu.dot_dimension_numbers<[1], [0], [0], [1], [0, 0, 1, 1], [], []>} : vector<8x32xf32>, vector<32x128xf32>, vector<8x128xf32> -> vector<8x128xf32>
    %16 = arith.addf %14, %15 : vector<8x128xf32>
    %17 = arith.negf %16 : vector<8x128xf32>
    %18 = math.exp %17 : vector<8x128xf32>
    %cst_15 = arith.constant 1.000000e+00 : f32
    %19 = vector.broadcast %cst_15 : f32 to vector<8x128xf32>
    %20 = arith.addf %19, %18 : vector<8x128xf32>
    %21 = arith.divf %19, %20 : vector<8x128xf32>
    %22 = math.tanh %16 : vector<8x128xf32>
    %23 = vector.extract_strided_slice %21 {offsets = [0, 0], sizes = [8, 32], strides = [1, 1]} : vector<8x128xf32> to vector<8x32xf32>
    %24 = vector.extract_strided_slice %21 {offsets = [0, 32], sizes = [8, 32], strides = [1, 1]} : vector<8x128xf32> to vector<8x32xf32>
    %25 = vector.extract_strided_slice %22 {offsets = [0, 64], sizes = [8, 32], strides = [1, 1]} : vector<8x128xf32> to vector<8x32xf32>
    %26 = vector.extract_strided_slice %21 {offsets = [0, 96], sizes = [8, 32], strides = [1, 1]} : vector<8x128xf32> to vector<8x32xf32>
    %27 = arith.mulf %24, %13 : vector<8x32xf32>
    %28 = arith.mulf %23, %25 : vector<8x32xf32>
    %29 = arith.addf %27, %28 : vector<8x32xf32>
    %30 = math.tanh %29 : vector<8x32xf32>
    %31 = arith.mulf %26, %30 : vector<8x32xf32>
    %c0_16 = arith.constant 0 : index
    %c0_17 = arith.constant 0 : index
    %c0_18 = arith.constant 0 : index
    %32 = vector.load %arg7[%c0_16, %c0_17, %c0_18] : memref<8x8x32xf32, #tpu.memory_space<vmem>>, vector<1x8x32xf32>
    %33 = vector.shape_cast %32 : vector<1x8x32xf32> to vector<8x32xf32>
    %34 = vector.shape_cast %31 : vector<8x32xf32> to vector<1x8x32xf32>
    tpu.vector_store %arg7[%c0_16, %c0_17, %c0_18], %34 {strides = array<i32>} : memref<8x8x32xf32, #tpu.memory_space<vmem>>, vector<1x8x32xf32>,
    %35 = vector.extract_strided_slice %10 {offsets = [8, 0], sizes = [8, 128], strides = [1, 1]} : vector<64x128xf32> to vector<8x128xf32>
    %cst_19 = arith.constant dense<0.000000e+00> : vector<8x128xf32>
    %36 = tpu.matmul %31, %11, %cst_19 {dimension_numbers = #tpu.dot_dimension_numbers<[1], [0], [0], [1], [0, 0, 1, 1], [], []>} : vector<8x32xf32>, vector<32x128xf32>, vector<8x128xf32> -> vector<8x128xf32>
    %37 = arith.addf %35, %36 : vector<8x128xf32>
    %38 = arith.negf %37 : vector<8x128xf32>
    %39 = math.exp %38 : vector<8x128xf32>
    %cst_20 = arith.constant 1.000000e+00 : f32
    %40 = vector.broadcast %cst_20 : f32 to vector<8x128xf32>
    %41 = arith.addf %40, %39 : vector<8x128xf32>
    %42 = arith.divf %40, %41 : vector<8x128xf32>
    %43 = math.tanh %37 : vector<8x128xf32>
    %44 = vector.extract_strided_slice %42 {offsets = [0, 0], sizes = [8, 32], strides = [1, 1]} : vector<8x128xf32> to vector<8x32xf32>
    %45 = vector.extract_strided_slice %42 {offsets = [0, 32], sizes = [8, 32], strides = [1, 1]} : vector<8x128xf32> to vector<8x32xf32>
    %46 = vector.extract_strided_slice %43 {offsets = [0, 64], sizes = [8, 32], strides = [1, 1]} : vector<8x128xf32> to vector<8x32xf32>
    %47 = vector.extract_strided_slice %42 {offsets = [0, 96], sizes = [8, 32], strides = [1, 1]} : vector<8x128xf32> to vector<8x32xf32>
    %48 = arith.mulf %45, %29 : vector<8x32xf32>
    %49 = arith.mulf %44, %46 : vector<8x32xf32>
    %50 = arith.addf %48, %49 : vector<8x32xf32>
    %51 = math.tanh %50 : vector<8x32xf32>
    %52 = arith.mulf %47, %51 : vector<8x32xf32>
    %c1 = arith.constant 1 : index
    %c0_21 = arith.constant 0 : index
    %c0_22 = arith.constant 0 : index
    %53 = vector.load %arg7[%c1, %c0_21, %c0_22] : memref<8x8x32xf32, #tpu.memory_space<vmem>>, vector<1x8x32xf32>
    %54 = vector.shape_cast %53 : vector<1x8x32xf32> to vector<8x32xf32>
    %55 = vector.shape_cast %52 : vector<8x32xf32> to vector<1x8x32xf32>
    tpu.vector_store %arg7[%c1, %c0_21, %c0_22], %55 {strides = array<i32>} : memref<8x8x32xf32, #tpu.memory_space<vmem>>, vector<1x8x32xf32>,
    %56 = vector.extract_strided_slice %10 {offsets = [16, 0], sizes = [8, 128], strides = [1, 1]} : vector<64x128xf32> to vector<8x128xf32>
    %cst_23 = arith.constant dense<0.000000e+00> : vector<8x128xf32>
    %57 = tpu.matmul %52, %11, %cst_23 {dimension_numbers = #tpu.dot_dimension_numbers<[1], [0], [0], [1], [0, 0, 1, 1], [], []>} : vector<8x32xf32>, vector<32x128xf32>, vector<8x128xf32> -> vector<8x128xf32>
    %58 = arith.addf %56, %57 : vector<8x128xf32>
    %59 = arith.negf %58 : vector<8x128xf32>
    %60 = math.exp %59 : vector<8x128xf32>
    %cst_24 = arith.constant 1.000000e+00 : f32
    %61 = vector.broadcast %cst_24 : f32 to vector<8x128xf32>
    %62 = arith.addf %61, %60 : vector<8x128xf32>
    %63 = arith.divf %61, %62 : vector<8x128xf32>
    %64 = math.tanh %58 : vector<8x128xf32>
    %65 = vector.extract_strided_slice %63 {offsets = [0, 0], sizes = [8, 32], strides = [1, 1]} : vector<8x128xf32> to vector<8x32xf32>
    %66 = vector.extract_strided_slice %63 {offsets = [0, 32], sizes = [8, 32], strides = [1, 1]} : vector<8x128xf32> to vector<8x32xf32>
    %67 = vector.extract_strided_slice %64 {offsets = [0, 64], sizes = [8, 32], strides = [1, 1]} : vector<8x128xf32> to vector<8x32xf32>
    %68 = vector.extract_strided_slice %63 {offsets = [0, 96], sizes = [8, 32], strides = [1, 1]} : vector<8x128xf32> to vector<8x32xf32>
    %69 = arith.mulf %66, %50 : vector<8x32xf32>
    %70 = arith.mulf %65, %67 : vector<8x32xf32>
    %71 = arith.addf %69, %70 : vector<8x32xf32>
    %72 = math.tanh %71 : vector<8x32xf32>
    %73 = arith.mulf %68, %72 : vector<8x32xf32>
    %c2 = arith.constant 2 : index
    %c0_25 = arith.constant 0 : index
    %c0_26 = arith.constant 0 : index
    %74 = vector.load %arg7[%c2, %c0_25, %c0_26] : memref<8x8x32xf32, #tpu.memory_space<vmem>>, vector<1x8x32xf32>
    %75 = vector.shape_cast %74 : vector<1x8x32xf32> to vector<8x32xf32>
    %76 = vector.shape_cast %73 : vector<8x32xf32> to vector<1x8x32xf32>
    tpu.vector_store %arg7[%c2, %c0_25, %c0_26], %76 {strides = array<i32>} : memref<8x8x32xf32, #tpu.memory_space<vmem>>, vector<1x8x32xf32>,
    %77 = vector.extract_strided_slice %10 {offsets = [24, 0], sizes = [8, 128], strides = [1, 1]} : vector<64x128xf32> to vector<8x128xf32>
    %cst_27 = arith.constant dense<0.000000e+00> : vector<8x128xf32>
    %78 = tpu.matmul %73, %11, %cst_27 {dimension_numbers = #tpu.dot_dimension_numbers<[1], [0], [0], [1], [0, 0, 1, 1], [], []>} : vector<8x32xf32>, vector<32x128xf32>, vector<8x128xf32> -> vector<8x128xf32>
    %79 = arith.addf %77, %78 : vector<8x128xf32>
    %80 = arith.negf %79 : vector<8x128xf32>
    %81 = math.exp %80 : vector<8x128xf32>
    %cst_28 = arith.constant 1.000000e+00 : f32
    %82 = vector.broadcast %cst_28 : f32 to vector<8x128xf32>
    %83 = arith.addf %82, %81 : vector<8x128xf32>
    %84 = arith.divf %82, %83 : vector<8x128xf32>
    %85 = math.tanh %79 : vector<8x128xf32>
    %86 = vector.extract_strided_slice %84 {offsets = [0, 0], sizes = [8, 32], strides = [1, 1]} : vector<8x128xf32> to vector<8x32xf32>
    %87 = vector.extract_strided_slice %84 {offsets = [0, 32], sizes = [8, 32], strides = [1, 1]} : vector<8x128xf32> to vector<8x32xf32>
    %88 = vector.extract_strided_slice %85 {offsets = [0, 64], sizes = [8, 32], strides = [1, 1]} : vector<8x128xf32> to vector<8x32xf32>
    %89 = vector.extract_strided_slice %84 {offsets = [0, 96], sizes = [8, 32], strides = [1, 1]} : vector<8x128xf32> to vector<8x32xf32>
    %90 = arith.mulf %87, %71 : vector<8x32xf32>
    %91 = arith.mulf %86, %88 : vector<8x32xf32>
    %92 = arith.addf %90, %91 : vector<8x32xf32>
    %93 = math.tanh %92 : vector<8x32xf32>
    %94 = arith.mulf %89, %93 : vector<8x32xf32>
    %c3 = arith.constant 3 : index
    %c0_29 = arith.constant 0 : index
    %c0_30 = arith.constant 0 : index
    %95 = vector.load %arg7[%c3, %c0_29, %c0_30] : memref<8x8x32xf32, #tpu.memory_space<vmem>>, vector<1x8x32xf32>
    %96 = vector.shape_cast %95 : vector<1x8x32xf32> to vector<8x32xf32>
    %97 = vector.shape_cast %94 : vector<8x32xf32> to vector<1x8x32xf32>
    tpu.vector_store %arg7[%c3, %c0_29, %c0_30], %97 {strides = array<i32>} : memref<8x8x32xf32, #tpu.memory_space<vmem>>, vector<1x8x32xf32>,
    %98 = vector.extract_strided_slice %10 {offsets = [32, 0], sizes = [8, 128], strides = [1, 1]} : vector<64x128xf32> to vector<8x128xf32>
    %cst_31 = arith.constant dense<0.000000e+00> : vector<8x128xf32>
    %99 = tpu.matmul %94, %11, %cst_31 {dimension_numbers = #tpu.dot_dimension_numbers<[1], [0], [0], [1], [0, 0, 1, 1], [], []>} : vector<8x32xf32>, vector<32x128xf32>, vector<8x128xf32> -> vector<8x128xf32>
    %100 = arith.addf %98, %99 : vector<8x128xf32>
    %101 = arith.negf %100 : vector<8x128xf32>
    %102 = math.exp %101 : vector<8x128xf32>
    %cst_32 = arith.constant 1.000000e+00 : f32
    %103 = vector.broadcast %cst_32 : f32 to vector<8x128xf32>
    %104 = arith.addf %103, %102 : vector<8x128xf32>
    %105 = arith.divf %103, %104 : vector<8x128xf32>
    %106 = math.tanh %100 : vector<8x128xf32>
    %107 = vector.extract_strided_slice %105 {offsets = [0, 0], sizes = [8, 32], strides = [1, 1]} : vector<8x128xf32> to vector<8x32xf32>
    %108 = vector.extract_strided_slice %105 {offsets = [0, 32], sizes = [8, 32], strides = [1, 1]} : vector<8x128xf32> to vector<8x32xf32>
    %109 = vector.extract_strided_slice %106 {offsets = [0, 64], sizes = [8, 32], strides = [1, 1]} : vector<8x128xf32> to vector<8x32xf32>
    %110 = vector.extract_strided_slice %105 {offsets = [0, 96], sizes = [8, 32], strides = [1, 1]} : vector<8x128xf32> to vector<8x32xf32>
    %111 = arith.mulf %108, %92 : vector<8x32xf32>
    %112 = arith.mulf %107, %109 : vector<8x32xf32>
    %113 = arith.addf %111, %112 : vector<8x32xf32>
    %114 = math.tanh %113 : vector<8x32xf32>
    %115 = arith.mulf %110, %114 : vector<8x32xf32>
    %c4 = arith.constant 4 : index
    %c0_33 = arith.constant 0 : index
    %c0_34 = arith.constant 0 : index
    %116 = vector.load %arg7[%c4, %c0_33, %c0_34] : memref<8x8x32xf32, #tpu.memory_space<vmem>>, vector<1x8x32xf32>
    %117 = vector.shape_cast %116 : vector<1x8x32xf32> to vector<8x32xf32>
    %118 = vector.shape_cast %115 : vector<8x32xf32> to vector<1x8x32xf32>
    tpu.vector_store %arg7[%c4, %c0_33, %c0_34], %118 {strides = array<i32>} : memref<8x8x32xf32, #tpu.memory_space<vmem>>, vector<1x8x32xf32>,
    %119 = vector.extract_strided_slice %10 {offsets = [40, 0], sizes = [8, 128], strides = [1, 1]} : vector<64x128xf32> to vector<8x128xf32>
    %cst_35 = arith.constant dense<0.000000e+00> : vector<8x128xf32>
    %120 = tpu.matmul %115, %11, %cst_35 {dimension_numbers = #tpu.dot_dimension_numbers<[1], [0], [0], [1], [0, 0, 1, 1], [], []>} : vector<8x32xf32>, vector<32x128xf32>, vector<8x128xf32> -> vector<8x128xf32>
    %121 = arith.addf %119, %120 : vector<8x128xf32>
    %122 = arith.negf %121 : vector<8x128xf32>
    %123 = math.exp %122 : vector<8x128xf32>
    %cst_36 = arith.constant 1.000000e+00 : f32
    %124 = vector.broadcast %cst_36 : f32 to vector<8x128xf32>
    %125 = arith.addf %124, %123 : vector<8x128xf32>
    %126 = arith.divf %124, %125 : vector<8x128xf32>
    %127 = math.tanh %121 : vector<8x128xf32>
    %128 = vector.extract_strided_slice %126 {offsets = [0, 0], sizes = [8, 32], strides = [1, 1]} : vector<8x128xf32> to vector<8x32xf32>
    %129 = vector.extract_strided_slice %126 {offsets = [0, 32], sizes = [8, 32], strides = [1, 1]} : vector<8x128xf32> to vector<8x32xf32>
    %130 = vector.extract_strided_slice %127 {offsets = [0, 64], sizes = [8, 32], strides = [1, 1]} : vector<8x128xf32> to vector<8x32xf32>
    %131 = vector.extract_strided_slice %126 {offsets = [0, 96], sizes = [8, 32], strides = [1, 1]} : vector<8x128xf32> to vector<8x32xf32>
    %132 = arith.mulf %129, %113 : vector<8x32xf32>
    %133 = arith.mulf %128, %130 : vector<8x32xf32>
    %134 = arith.addf %132, %133 : vector<8x32xf32>
    %135 = math.tanh %134 : vector<8x32xf32>
    %136 = arith.mulf %131, %135 : vector<8x32xf32>
    %c5 = arith.constant 5 : index
    %c0_37 = arith.constant 0 : index
    %c0_38 = arith.constant 0 : index
    %137 = vector.load %arg7[%c5, %c0_37, %c0_38] : memref<8x8x32xf32, #tpu.memory_space<vmem>>, vector<1x8x32xf32>
    %138 = vector.shape_cast %137 : vector<1x8x32xf32> to vector<8x32xf32>
    %139 = vector.shape_cast %136 : vector<8x32xf32> to vector<1x8x32xf32>
    tpu.vector_store %arg7[%c5, %c0_37, %c0_38], %139 {strides = array<i32>} : memref<8x8x32xf32, #tpu.memory_space<vmem>>, vector<1x8x32xf32>,
    %140 = vector.extract_strided_slice %10 {offsets = [48, 0], sizes = [8, 128], strides = [1, 1]} : vector<64x128xf32> to vector<8x128xf32>
    %cst_39 = arith.constant dense<0.000000e+00> : vector<8x128xf32>
    %141 = tpu.matmul %136, %11, %cst_39 {dimension_numbers = #tpu.dot_dimension_numbers<[1], [0], [0], [1], [0, 0, 1, 1], [], []>} : vector<8x32xf32>, vector<32x128xf32>, vector<8x128xf32> -> vector<8x128xf32>
    %142 = arith.addf %140, %141 : vector<8x128xf32>
    %143 = arith.negf %142 : vector<8x128xf32>
    %144 = math.exp %143 : vector<8x128xf32>
    %cst_40 = arith.constant 1.000000e+00 : f32
    %145 = vector.broadcast %cst_40 : f32 to vector<8x128xf32>
    %146 = arith.addf %145, %144 : vector<8x128xf32>
    %147 = arith.divf %145, %146 : vector<8x128xf32>
    %148 = math.tanh %142 : vector<8x128xf32>
    %149 = vector.extract_strided_slice %147 {offsets = [0, 0], sizes = [8, 32], strides = [1, 1]} : vector<8x128xf32> to vector<8x32xf32>
    %150 = vector.extract_strided_slice %147 {offsets = [0, 32], sizes = [8, 32], strides = [1, 1]} : vector<8x128xf32> to vector<8x32xf32>
    %151 = vector.extract_strided_slice %148 {offsets = [0, 64], sizes = [8, 32], strides = [1, 1]} : vector<8x128xf32> to vector<8x32xf32>
    %152 = vector.extract_strided_slice %147 {offsets = [0, 96], sizes = [8, 32], strides = [1, 1]} : vector<8x128xf32> to vector<8x32xf32>
    %153 = arith.mulf %150, %134 : vector<8x32xf32>
    %154 = arith.mulf %149, %151 : vector<8x32xf32>
    %155 = arith.addf %153, %154 : vector<8x32xf32>
    %156 = math.tanh %155 : vector<8x32xf32>
    %157 = arith.mulf %152, %156 : vector<8x32xf32>
    %c6 = arith.constant 6 : index
    %c0_41 = arith.constant 0 : index
    %c0_42 = arith.constant 0 : index
    %158 = vector.load %arg7[%c6, %c0_41, %c0_42] : memref<8x8x32xf32, #tpu.memory_space<vmem>>, vector<1x8x32xf32>
    %159 = vector.shape_cast %158 : vector<1x8x32xf32> to vector<8x32xf32>
    %160 = vector.shape_cast %157 : vector<8x32xf32> to vector<1x8x32xf32>
    tpu.vector_store %arg7[%c6, %c0_41, %c0_42], %160 {strides = array<i32>} : memref<8x8x32xf32, #tpu.memory_space<vmem>>, vector<1x8x32xf32>,
    %161 = vector.extract_strided_slice %10 {offsets = [56, 0], sizes = [8, 128], strides = [1, 1]} : vector<64x128xf32> to vector<8x128xf32>
    %cst_43 = arith.constant dense<0.000000e+00> : vector<8x128xf32>
    %162 = tpu.matmul %157, %11, %cst_43 {dimension_numbers = #tpu.dot_dimension_numbers<[1], [0], [0], [1], [0, 0, 1, 1], [], []>} : vector<8x32xf32>, vector<32x128xf32>, vector<8x128xf32> -> vector<8x128xf32>
    %163 = arith.addf %161, %162 : vector<8x128xf32>
    %164 = arith.negf %163 : vector<8x128xf32>
    %165 = math.exp %164 : vector<8x128xf32>
    %cst_44 = arith.constant 1.000000e+00 : f32
    %166 = vector.broadcast %cst_44 : f32 to vector<8x128xf32>
    %167 = arith.addf %166, %165 : vector<8x128xf32>
    %168 = arith.divf %166, %167 : vector<8x128xf32>
    %169 = math.tanh %163 : vector<8x128xf32>
    %170 = vector.extract_strided_slice %168 {offsets = [0, 0], sizes = [8, 32], strides = [1, 1]} : vector<8x128xf32> to vector<8x32xf32>
    %171 = vector.extract_strided_slice %168 {offsets = [0, 32], sizes = [8, 32], strides = [1, 1]} : vector<8x128xf32> to vector<8x32xf32>
    %172 = vector.extract_strided_slice %169 {offsets = [0, 64], sizes = [8, 32], strides = [1, 1]} : vector<8x128xf32> to vector<8x32xf32>
    %173 = vector.extract_strided_slice %168 {offsets = [0, 96], sizes = [8, 32], strides = [1, 1]} : vector<8x128xf32> to vector<8x32xf32>
    %174 = arith.mulf %171, %155 : vector<8x32xf32>
    %175 = arith.mulf %170, %172 : vector<8x32xf32>
    %176 = arith.addf %174, %175 : vector<8x32xf32>
    %177 = math.tanh %176 : vector<8x32xf32>
    %178 = arith.mulf %173, %177 : vector<8x32xf32>
    %c7 = arith.constant 7 : index
    %c0_45 = arith.constant 0 : index
    %c0_46 = arith.constant 0 : index
    %179 = vector.load %arg7[%c7, %c0_45, %c0_46] : memref<8x8x32xf32, #tpu.memory_space<vmem>>, vector<1x8x32xf32>
    %180 = vector.shape_cast %179 : vector<1x8x32xf32> to vector<8x32xf32>
    %181 = vector.shape_cast %178 : vector<8x32xf32> to vector<1x8x32xf32>
    tpu.vector_store %arg7[%c7, %c0_45, %c0_46], %181 {strides = array<i32>} : memref<8x8x32xf32, #tpu.memory_space<vmem>>, vector<1x8x32xf32>,
    return
  }
  func.func @transform_0(%arg0: i32) -> (i32, i32) {
    %c0_i32 = arith.constant 0 : i32
    %c0_i32_0 = arith.constant 0 : i32
    %c0_i32_1 = arith.constant 0 : i32
    return %c0_i32, %c0_i32_0 : i32, i32
  }
  func.func @transform_1(%arg0: i32) -> (i32, i32) {
    %c0_i32 = arith.constant 0 : i32
    %c0_i32_0 = arith.constant 0 : i32
    %c0_i32_1 = arith.constant 0 : i32
    return %c0_i32, %c0_i32_0 : i32, i32
  }
  func.func @transform_2(%arg0: i32) -> (i32, i32) {
    %c0_i32 = arith.constant 0 : i32
    %c0_i32_0 = arith.constant 0 : i32
    %c0_i32_1 = arith.constant 0 : i32
    return %c0_i32, %c0_i32_0 : i32, i32
  }
  func.func @transform_3(%arg0: i32) -> (i32, i32) {
    %c0_i32 = arith.constant 0 : i32
    %c0_i32_0 = arith.constant 0 : i32
    %c0_i32_1 = arith.constant 0 : i32
    return %c0_i32, %c0_i32_0 : i32, i32
  }
  func.func @transform_4(%arg0: i32) -> (i32, i32) {
    %c0_i32 = arith.constant 0 : i32
    %c0_i32_0 = arith.constant 0 : i32
    %c0_i32_1 = arith.constant 0 : i32
    return %c0_i32, %c0_i32_0 : i32, i32
  }
  func.func @transform_5(%arg0: i32) -> (i32, i32) {
    %c0_i32 = arith.constant 0 : i32
    %c0_i32_0 = arith.constant 0 : i32
    %c0_i32_1 = arith.constant 0 : i32
    return %c0_i32, %c0_i32_0 : i32, i32
  }
  func.func @transform_6(%arg0: i32) -> (i32, i32, i32) {
    %c0_i32 = arith.constant 0 : i32
    %c0_i32_0 = arith.constant 0 : i32
    %c0_i32_1 = arith.constant 0 : i32
    %c0_i32_2 = arith.constant 0 : i32
    return %c0_i32, %c0_i32_0, %c0_i32_1 : i32, i32, i32
  }
}

</mosaic_0001>

<llo_original>
// kernel: tpu_custom_call.1
$region0: #{tpu_custom_call.1}
  #allocation0 [shape = 'u32[]', space=smem, size = 0x4, offset = 0x4, fixed_abs, tag = 'smem constant byte address 0x4 - core index']
  #allocation1 [shape = 'u32[144,128]{1,0:T(1,128)}', space=vmem, size = 0x12000, scoped, tag = 'internal scratch']
  %s0 = inlined_call_operand.vmem [shape: f32[64,2], index: 0, kind: input, shape index: {}]
  %s1 = inlined_call_operand.vmem [shape: f32[2,16], index: 1, kind: input, shape index: {}]
  %s2 = inlined_call_operand.vmem [shape: f32[1,16], index: 2, kind: input, shape index: {}]
  %s3 = inlined_call_operand.vmem [shape: f32[16,128], index: 3, kind: input, shape index: {}]
  %s4 = inlined_call_operand.vmem [shape: f32[32,128], index: 4, kind: input, shape index: {}]
  %s5 = inlined_call_operand.vmem [shape: f32[1,128], index: 5, kind: input, shape index: {}]
  %s6 = inlined_call_operand.hbm [shape: f32[8,8,32], index: 6, kind: output, shape index: {}]
  %s7 = sld [smem:[#allocation0]]
  $region34: #{tpu_custom_call.1} parent=0
    _
  %s9 = ssub.s32 1, %s7
  %s10 = scalar_select 0, %s9, %s7
  $region1: #{tpu_custom_call.1} parent=0
    #allocation2 [shape = 'u8[32768]{0}', space=vmem, size = 0x8000, scoped, tag = 'output window, operand 0, single buffered']
    #allocation3 [shape = 's32[1]{0}', space=sflag, size = 0x4, scoped, tag = 'scoped memory for tpu_custom_call.1']
    %11 = vsyncpa [#allocation3], 0
    // Predicated region
    $region2: #{tpu_custom_call.1} parent=1 // pred_check
      _
    $region3: #{tpu_custom_call.1} parent=1 // pred_check_branch
      %13 = sbr.rel (0) target = $region5
    $region4: #{tpu_custom_call.1} parent=1 // pred_region
      _
    $region5: #{tpu_custom_call.1} parent=1 // pred_fallthru
      _
    // Predicated region
    $region6: #{tpu_custom_call.1} parent=1 // pred_check
      _
    $region7: #{tpu_custom_call.1} parent=1 // pred_check_branch
      %15 = sbr.rel (0) target = $region9
    $region8: #{tpu_custom_call.1} parent=1 // pred_region
      _
    $region9: #{tpu_custom_call.1} parent=1 // pred_fallthru
      _
    // Predicated region
    $region10: #{tpu_custom_call.1} parent=1 // pred_check
      _
    $region11: #{tpu_custom_call.1} parent=1 // pred_check_branch
      %17 = sbr.rel (0) target = $region13
    $region12: #{tpu_custom_call.1} parent=1 // pred_region
      _
    $region13: #{tpu_custom_call.1} parent=1 // pred_fallthru
      _
    // Predicated region
    $region14: #{tpu_custom_call.1} parent=1 // pred_check
      _
    $region15: #{tpu_custom_call.1} parent=1 // pred_check_branch
      %19 = sbr.rel (0) target = $region17
    $region16: #{tpu_custom_call.1} parent=1 // pred_region
      _
    $region17: #{tpu_custom_call.1} parent=1 // pred_fallthru
      _
    // Predicated region
    $region18: #{tpu_custom_call.1} parent=1 // pred_check
      _
    $region19: #{tpu_custom_call.1} parent=1 // pred_check_branch
      %21 = sbr.rel (0) target = $region21
    $region20: #{tpu_custom_call.1} parent=1 // pred_region
      _
    $region21: #{tpu_custom_call.1} parent=1 // pred_fallthru
      _
    // Predicated region
    $region22: #{tpu_custom_call.1} parent=1 // pred_check
      _
    $region23: #{tpu_custom_call.1} parent=1 // pred_check_branch
      %23 = sbr.rel (0) target = $region25
    $region24: #{tpu_custom_call.1} parent=1 // pred_region
      _
    $region25: #{tpu_custom_call.1} parent=1 // pred_fallthru
      _
    %v24 = vld [vmem:[%s0] sm:$0xff]
    %v25 = vld [vmem:[%s0 + $0x8] sm:$0xff]
    %v26 = vld [vmem:[%s0 + $0x10] sm:$0xff]
    %v27 = vld [vmem:[%s0 + $0x18] sm:$0xff]
    %v28 = vld [vmem:[%s0 + $0x20] sm:$0xff]
    %v29 = vld [vmem:[%s0 + $0x28] sm:$0xff]
    %v30 = vld [vmem:[%s0 + $0x30] sm:$0xff]
    %v31 = vld [vmem:[%s0 + $0x38] sm:$0xff]
    %v32 = vld [vmem:[%s1] sm:$0x3]
    %v33 = vld [vmem:[%s2] sm:$0x1]
    %v35 = vlaneseq
    %v36 = vshrl.u32 %v35, 7
    %v37 = vsub.s32 0, %v36
    %v38 = vrot.slane %v33, %v37
    %vm40 = vcmask 15360
    %v42 = vsel %vm40, %v24, 0
    %v45 = vsel %vm40, %v25, 0
    %v48 = vsel %vm40, %v26, 0
    %v51 = vsel %vm40, %v27, 0
    %v54 = vsel %vm40, %v28, 0
    %v57 = vsel %vm40, %v29, 0
    %v60 = vsel %vm40, %v30, 0
    %v63 = vsel %vm40, %v31, 0
    %vm65 = vcmask 1041408
    %v67 = vsel %vm65, %v32, 0
    %69 = vmatprep.subr.mxu0 0.0
    %70 = vmatpush1.msra.mxu0 %v67
    %71 = vmatprep.subr.mxu0 0.0
    %72 = vmatpush1.msra.mxu0 0.0
    %73 = vmatprep.subr.mxu0 0.0
    %74 = vmatpush1.msra.mxu0 0.0
    %75 = vmatprep.subr.mxu0 0.0
    %76 = vmatpush1.msra.mxu0 0.0
    %77 = vmatprep.subr.mxu0 0.0
    %78 = vmatpush1.msra.mxu0 0.0
    %79 = vmatprep.subr.mxu0 0.0
    %80 = vmatpush1.msra.mxu0 0.0
    %81 = vmatprep.subr.mxu0 0.0
    %82 = vmatpush1.msra.mxu0 0.0
    %83 = vmatprep.subr.mxu0 0.0
    %84 = vmatpush1.msra.mxu0 0.0
    %85 = vmatprep.subr.mxu0 0.0
    %86 = vmatpush1.msra.mxu0 0.0
    %87 = vmatprep.subr.mxu0 0.0
    %88 = vmatpush1.msra.mxu0 0.0
    %89 = vmatprep.subr.mxu0 0.0
    %90 = vmatpush1.msra.mxu0 0.0
    %91 = vmatprep.subr.mxu0 0.0
    %92 = vmatpush1.msra.mxu0 0.0
    %93 = vmatprep.subr.mxu0 0.0
    %94 = vmatpush1.msra.mxu0 0.0
    %95 = vmatprep.subr.mxu0 0.0
    %96 = vmatpush1.msra.mxu0 0.0
    %97 = vmatprep.subr.mxu0 0.0
    %98 = vmatpush1.msra.mxu0 0.0
    %99 = vmatprep.subr.mxu0 0.0
    %100 = vmatpush1.msra.mxu0 0.0
    %101 = vmatprep.subr.mxu0 0.0
    %102 = vmatpush1.msra.mxu0 0.0
    %103 = vmatprep.subr.mxu0 0.0
    %104 = vmatpush1.msra.mxu0 0.0
    %105 = vmatprep.subr.mxu0 0.0
    %106 = vmatpush1.msra.mxu0 0.0
    %107 = vmatprep.subr.mxu0 0.0
    %108 = vmatpush1.msra.mxu0 0.0
    %109 = vmatprep.subr.mxu0 0.0
    %110 = vmatpush1.msra.mxu0 0.0
    %111 = vmatprep.subr.mxu0 0.0
    %112 = vmatpush1.msra.mxu0 0.0
    %113 = vmatprep.subr.mxu0 0.0
    %114 = vmatpush1.msra.mxu0 0.0
    %115 = vmatprep.subr.mxu0 0.0
    %116 = vmatpush1.msra.mxu0 0.0
    %117 = vmatprep.subr.mxu0 0.0
    %118 = vmatpush1.msra.mxu0 0.0
    %119 = vmatprep.subr.mxu0 0.0
    %120 = vmatpush1.msra.mxu0 0.0
    %121 = vmatprep.subr.mxu0 0.0
    %122 = vmatpush1.msra.mxu0 0.0
    %123 = vmatprep.subr.mxu0 0.0
    %124 = vmatpush1.msra.mxu0 0.0
    %125 = vmatprep.subr.mxu0 0.0
    %126 = vmatpush1.msra.mxu0 0.0
    %127 = vmatprep.subr.mxu0 0.0
    %128 = vmatpush1.msra.mxu0 0.0
    %129 = vmatprep.subr.mxu0 0.0
    %130 = vmatpush1.msra.mxu0 0.0
    %131 = vmatprep.subr.mxu0 0.0
    %132 = vmatpush1.msra.mxu0 0.0
    %133 = vmatprep.mubr.f32.mxu0 0.0
    %134 = vmatmul.mubr.f32.gmra.mrb[0].mxu0 %v42
    %v135 = vpop.f32.mrb[0].mxu0
    %v136 = vadd.f32 %v38, %v135
    %v137 = vpop.f32.mrb[0].mxu0
    %138 = vmatprep.mubr.f32.mxu0 0.0
    %139 = vmatmul.mubr.f32.gmra.mrb[0].mxu0 %v45
    %v140 = vpop.f32.mrb[0].mxu0
    %v141 = vadd.f32 %v38, %v140
    %v142 = vpop.f32.mrb[0].mxu0
    %143 = vmatprep.mubr.f32.mxu0 0.0
    %144 = vmatmul.mubr.f32.gmra.mrb[0].mxu0 %v48
    %v145 = vpop.f32.mrb[0].mxu0
    %v146 = vadd.f32 %v38, %v145
    %v147 = vpop.f32.mrb[0].mxu0
    %148 = vmatprep.mubr.f32.mxu0 0.0
    %149 = vmatmul.mubr.f32.gmra.mrb[0].mxu0 %v51
    %v150 = vpop.f32.mrb[0].mxu0
    %v151 = vadd.f32 %v38, %v150
    %v152 = vpop.f32.mrb[0].mxu0
    %153 = vmatprep.mubr.f32.mxu0 0.0
    %154 = vmatmul.mubr.f32.gmra.mrb[0].mxu0 %v54
    %v155 = vpop.f32.mrb[0].mxu0
    %v156 = vadd.f32 %v38, %v155
    %v157 = vpop.f32.mrb[0].mxu0
    %158 = vmatprep.mubr.f32.mxu0 0.0
    %159 = vmatmul.mubr.f32.gmra.mrb[0].mxu0 %v57
    %v160 = vpop.f32.mrb[0].mxu0
    %v161 = vadd.f32 %v38, %v160
    %v162 = vpop.f32.mrb[0].mxu0
    %163 = vmatprep.mubr.f32.mxu0 0.0
    %164 = vmatmul.mubr.f32.gmra.mrb[0].mxu0 %v60
    %v165 = vpop.f32.mrb[0].mxu0
    %v166 = vadd.f32 %v38, %v165
    %v167 = vpop.f32.mrb[0].mxu0
    %168 = vmatprep.mubr.f32.mxu0 0.0
    %169 = vmatmul.mubr.f32.gmra.mrb[0].mxu0 %v63
    %v170 = vpop.f32.mrb[0].mxu0
    %v171 = vadd.f32 %v38, %v170
    %v172 = vpop.f32.mrb[0].mxu0
    %173 = vdwg.mxu0
    %v174 = vld [vmem:[%s3] sm:$0xff]
    %v175 = vld [vmem:[%s3 + $0x8] sm:$0xff]
    %v176 = vld [vmem:[%s5] sm:$0x1]
    %v178 = vlaneseq
    %v179 = vshrl.u32 %v178, 7
    %v180 = vsub.s32 0, %v179
    %v181 = vrot.slane %v176, %v180
    %vm183 = vcmask 130048
    %v185 = vsel %vm183, %v136, 0
    %v188 = vsel %vm183, %v141, 0
    %v191 = vsel %vm183, %v146, 0
    %v194 = vsel %vm183, %v151, 0
    %v197 = vsel %vm183, %v156, 0
    %v200 = vsel %vm183, %v161, 0
    %v203 = vsel %vm183, %v166, 0
    %v206 = vsel %vm183, %v171, 0
    %208 = vmatprep.subr.mxu0 0.0
    %209 = vmatpush1.msra.mxu0 %v174
    %210 = vmatprep.subr.mxu0 0.0
    %211 = vmatpush1.msra.mxu0 %v175
    %212 = vmatprep.subr.mxu0 0.0
    %213 = vmatpush1.msra.mxu0 0.0
    %214 = vmatprep.subr.mxu0 0.0
    %215 = vmatpush1.msra.mxu0 0.0
    %216 = vmatprep.subr.mxu0 0.0
    %217 = vmatpush1.msra.mxu0 0.0
    %218 = vmatprep.subr.mxu0 0.0
    %219 = vmatpush1.msra.mxu0 0.0
    %220 = vmatprep.subr.mxu0 0.0
    %221 = vmatpush1.msra.mxu0 0.0
    %222 = vmatprep.subr.mxu0 0.0
    %223 = vmatpush1.msra.mxu0 0.0
    %224 = vmatprep.subr.mxu0 0.0
    %225 = vmatpush1.msra.mxu0 0.0
    %226 = vmatprep.subr.mxu0 0.0
    %227 = vmatpush1.msra.mxu0 0.0
    %228 = vmatprep.subr.mxu0 0.0
    %229 = vmatpush1.msra.mxu0 0.0
    %230 = vmatprep.subr.mxu0 0.0
    %231 = vmatpush1.msra.mxu0 0.0
    %232 = vmatprep.subr.mxu0 0.0
    %233 = vmatpush1.msra.mxu0 0.0
    %234 = vmatprep.subr.mxu0 0.0
    %235 = vmatpush1.msra.mxu0 0.0
    %236 = vmatprep.subr.mxu0 0.0
    %237 = vmatpush1.msra.mxu0 0.0
    %238 = vmatprep.subr.mxu0 0.0
    %239 = vmatpush1.msra.mxu0 0.0
    %240 = vmatprep.subr.mxu0 0.0
    %241 = vmatpush1.msra.mxu0 0.0
    %242 = vmatprep.subr.mxu0 0.0
    %243 = vmatpush1.msra.mxu0 0.0
    %244 = vmatprep.subr.mxu0 0.0
    %245 = vmatpush1.msra.mxu0 0.0
    %246 = vmatprep.subr.mxu0 0.0
    %247 = vmatpush1.msra.mxu0 0.0
    %248 = vmatprep.subr.mxu0 0.0
    %249 = vmatpush1.msra.mxu0 0.0
    %250 = vmatprep.subr.mxu0 0.0
    %251 = vmatpush1.msra.mxu0 0.0
    %252 = vmatprep.subr.mxu0 0.0
    %253 = vmatpush1.msra.mxu0 0.0
    %254 = vmatprep.subr.mxu0 0.0
    %255 = vmatpush1.msra.mxu0 0.0
    %256 = vmatprep.subr.mxu0 0.0
    %257 = vmatpush1.msra.mxu0 0.0
    %258 = vmatprep.subr.mxu0 0.0
    %259 = vmatpush1.msra.mxu0 0.0
    %260 = vmatprep.subr.mxu0 0.0
    %261 = vmatpush1.msra.mxu0 0.0
    %262 = vmatprep.subr.mxu0 0.0
    %263 = vmatpush1.msra.mxu0 0.0
    %264 = vmatprep.subr.mxu0 0.0
    %265 = vmatpush1.msra.mxu0 0.0
    %266 = vmatprep.subr.mxu0 0.0
    %267 = vmatpush1.msra.mxu0 0.0
    %268 = vmatprep.subr.mxu0 0.0
    %269 = vmatpush1.msra.mxu0 0.0
    %270 = vmatprep.subr.mxu0 0.0
    %271 = vmatpush1.msra.mxu0 0.0
    %272 = vmatprep.mubr.f32.mxu0 0.0
    %273 = vmatmul.mubr.f32.gmra.mrb[0].mxu0 %v185
    %v274 = vpop.f32.mrb[0].mxu0
    %v275 = vadd.f32 %v181, %v274
    %v276 = vpop.f32.mrb[0].mxu0
    %277 = vmatprep.mubr.f32.mxu0 0.0
    %278 = vmatmul.mubr.f32.gmra.mrb[0].mxu0 %v188
    %v279 = vpop.f32.mrb[0].mxu0
    %v280 = vadd.f32 %v181, %v279
    %v281 = vpop.f32.mrb[0].mxu0
    %282 = vmatprep.mubr.f32.mxu0 0.0
    %283 = vmatmul.mubr.f32.gmra.mrb[0].mxu0 %v191
    %v284 = vpop.f32.mrb[0].mxu0
    %v285 = vadd.f32 %v181, %v284
    %v286 = vpop.f32.mrb[0].mxu0
    %287 = vmatprep.mubr.f32.mxu0 0.0
    %288 = vmatmul.mubr.f32.gmra.mrb[0].mxu0 %v194
    %v289 = vpop.f32.mrb[0].mxu0
    %v290 = vadd.f32 %v181, %v289
    %v291 = vpop.f32.mrb[0].mxu0
    %292 = vmatprep.mubr.f32.mxu0 0.0
    %293 = vmatmul.mubr.f32.gmra.mrb[0].mxu0 %v197
    %v294 = vpop.f32.mrb[0].mxu0
    %v295 = vadd.f32 %v181, %v294
    %v296 = vpop.f32.mrb[0].mxu0
    %297 = vmatprep.mubr.f32.mxu0 0.0
    %298 = vmatmul.mubr.f32.gmra.mrb[0].mxu0 %v200
    %v299 = vpop.f32.mrb[0].mxu0
    %v300 = vadd.f32 %v181, %v299
    %v301 = vpop.f32.mrb[0].mxu0
    %302 = vmatprep.mubr.f32.mxu0 0.0
    %303 = vmatmul.mubr.f32.gmra.mrb[0].mxu0 %v203
    %v304 = vpop.f32.mrb[0].mxu0
    %v305 = vadd.f32 %v181, %v304
    %v306 = vpop.f32.mrb[0].mxu0
    %307 = vmatprep.mubr.f32.mxu0 0.0
    %308 = vmatmul.mubr.f32.gmra.mrb[0].mxu0 %v206
    %v309 = vpop.f32.mrb[0].mxu0
    %v310 = vadd.f32 %v181, %v309
    %v311 = vpop.f32.mrb[0].mxu0
    %312 = vdwg.mxu0
    %v313 = vld [vmem:[%s4] sm:$0xff]
    %v314 = vld [vmem:[%s4 + $0x8] sm:$0xff]
    %v315 = vld [vmem:[%s4 + $0x10] sm:$0xff]
    %v316 = vld [vmem:[%s4 + $0x18] sm:$0xff]
    %vm317 = vcmask 261120
    %v319 = vsel %vm317, 0.0, 0
    %321 = vmatprep.subr.mxu0 0.0
    %322 = vmatpush1.msra.mxu0 %v313
    %323 = vmatprep.subr.mxu0 0.0
    %324 = vmatpush1.msra.mxu0 %v314
    %325 = vmatprep.subr.mxu0 0.0
    %326 = vmatpush1.msra.mxu0 %v315
    %327 = vmatprep.subr.mxu0 0.0
    %328 = vmatpush1.msra.mxu0 %v316
    %329 = vmatprep.subr.mxu0 0.0
    %330 = vmatpush1.msra.mxu0 0.0
    %331 = vmatprep.subr.mxu0 0.0
    %332 = vmatpush1.msra.mxu0 0.0
    %333 = vmatprep.subr.mxu0 0.0
    %334 = vmatpush1.msra.mxu0 0.0
    %335 = vmatprep.subr.mxu0 0.0
    %336 = vmatpush1.msra.mxu0 0.0
    %337 = vmatprep.subr.mxu0 0.0
    %338 = vmatpush1.msra.mxu0 0.0
    %339 = vmatprep.subr.mxu0 0.0
    %340 = vmatpush1.msra.mxu0 0.0
    %341 = vmatprep.subr.mxu0 0.0
    %342 = vmatpush1.msra.mxu0 0.0
    %343 = vmatprep.subr.mxu0 0.0
    %344 = vmatpush1.msra.mxu0 0.0
    %345 = vmatprep.subr.mxu0 0.0
    %346 = vmatpush1.msra.mxu0 0.0
    %347 = vmatprep.subr.mxu0 0.0
    %348 = vmatpush1.msra.mxu0 0.0
    %349 = vmatprep.subr.mxu0 0.0
    %350 = vmatpush1.msra.mxu0 0.0
    %351 = vmatprep.subr.mxu0 0.0
    %352 = vmatpush1.msra.mxu0 0.0
    %353 = vmatprep.subr.mxu0 0.0
    %354 = vmatpush1.msra.mxu0 0.0
    %355 = vmatprep.subr.mxu0 0.0
    %356 = vmatpush1.msra.mxu0 0.0
    %357 = vmatprep.subr.mxu0 0.0
    %358 = vmatpush1.msra.mxu0 0.0
    %359 = vmatprep.subr.mxu0 0.0
    %360 = vmatpush1.msra.mxu0 0.0
    %361 = vmatprep.subr.mxu0 0.0
    %362 = vmatpush1.msra.mxu0 0.0
    %363 = vmatprep.subr.mxu0 0.0
    %364 = vmatpush1.msra.mxu0 0.0
    %365 = vmatprep.subr.mxu0 0.0
    %366 = vmatpush1.msra.mxu0 0.0
    %367 = vmatprep.subr.mxu0 0.0
    %368 = vmatpush1.msra.mxu0 0.0
    %369 = vmatprep.subr.mxu0 0.0
    %370 = vmatpush1.msra.mxu0 0.0
    %371 = vmatprep.subr.mxu0 0.0
    %372 = vmatpush1.msra.mxu0 0.0
    %373 = vmatprep.subr.mxu0 0.0
    %374 = vmatpush1.msra.mxu0 0.0
    %375 = vmatprep.subr.mxu0 0.0
    %376 = vmatpush1.msra.mxu0 0.0
    %377 = vmatprep.subr.mxu0 0.0
    %378 = vmatpush1.msra.mxu0 0.0
    %379 = vmatprep.subr.mxu0 0.0
    %380 = vmatpush1.msra.mxu0 0.0
    %381 = vmatprep.subr.mxu0 0.0
    %382 = vmatpush1.msra.mxu0 0.0
    %383 = vmatprep.subr.mxu0 0.0
    %384 = vmatpush1.msra.mxu0 0.0
    %385 = vmatprep.mubr.f32.mxu0 0.0
    %386 = vmatmul.mubr.f32.gmra.mrb[0].mxu0 %v319
    %v387 = vpop.f32.mrb[0].mxu0
    %v388 = vadd.f32 0.0, %v387
    %v389 = vpop.f32.mrb[0].mxu0
    %390 = vdwg.mxu0
    %v391 = vadd.f32 %v275, %v388
    %v392 = vxor.u32 %v391, 2147483648
    %v393 = vmul.f32 %v392, 1.442695
    %v394 = vpow.pop %v393
    %v395 = vadd.f32 %v394, 1.0
    %v396 = vrcp.pop %v395
    %v397 = vmul.f32 1.0, %v396
    %v398 = vtanh.pop %v391
    %v399 = vmul.f32 %v397, 0.0
    %401 = vrot.lane.b32.xlu0 %v398, 64
    %v402 = vpop.permute.xlu0 %401
    %v404 = vmul.f32 %v397, %v402
    %406 = vrot.lane.b32.xlu0 %v404, 32
    %v407 = vpop.permute.xlu0 %406
    %v409 = vadd.f32 %v399, %v407
    %v410 = vtanh.pop %v409
    %412 = vrot.lane.b32.xlu0 %v410, 64
    %v413 = vpop.permute.xlu0 %412
    %v415 = vmul.f32 %v397, %v413
    %417 = vrot.lane.b32.xlu0 %v415, 32
    %v418 = vpop.permute.xlu0 %417
    %420 = vst.msk [vmem:[#allocation2] sm:$0xff] %vm317, %v418
    %v421 = vsel %vm317, %v418, 0
    %423 = vmatprep.subr.mxu0 0.0
    %424 = vmatpush1.msra.mxu0 %v313
    %425 = vmatprep.subr.mxu0 0.0
    %426 = vmatpush1.msra.mxu0 %v314
    %427 = vmatprep.subr.mxu0 0.0
    %428 = vmatpush1.msra.mxu0 %v315
    %429 = vmatprep.subr.mxu0 0.0
    %430 = vmatpush1.msra.mxu0 %v316
    %431 = vmatprep.subr.mxu0 0.0
    %432 = vmatpush1.msra.mxu0 0.0
    %433 = vmatprep.subr.mxu0 0.0
    %434 = vmatpush1.msra.mxu0 0.0
    %435 = vmatprep.subr.mxu0 0.0
    %436 = vmatpush1.msra.mxu0 0.0
    %437 = vmatprep.subr.mxu0 0.0
    %438 = vmatpush1.msra.mxu0 0.0
    %439 = vmatprep.subr.mxu0 0.0
    %440 = vmatpush1.msra.mxu0 0.0
    %441 = vmatprep.subr.mxu0 0.0
    %442 = vmatpush1.msra.mxu0 0.0
    %443 = vmatprep.subr.mxu0 0.0
    %444 = vmatpush1.msra.mxu0 0.0
    %445 = vmatprep.subr.mxu0 0.0
    %446 = vmatpush1.msra.mxu0 0.0
    %447 = vmatprep.subr.mxu0 0.0
    %448 = vmatpush1.msra.mxu0 0.0
    %449 = vmatprep.subr.mxu0 0.0
    %450 = vmatpush1.msra.mxu0 0.0
    %451 = vmatprep.subr.mxu0 0.0
    %452 = vmatpush1.msra.mxu0 0.0
    %453 = vmatprep.subr.mxu0 0.0
    %454 = vmatpush1.msra.mxu0 0.0
    %455 = vmatprep.subr.mxu0 0.0
    %456 = vmatpush1.msra.mxu0 0.0
    %457 = vmatprep.subr.mxu0 0.0
    %458 = vmatpush1.msra.mxu0 0.0
    %459 = vmatprep.subr.mxu0 0.0
    %460 = vmatpush1.msra.mxu0 0.0
    %461 = vmatprep.subr.mxu0 0.0
    %462 = vmatpush1.msra.mxu0 0.0
    %463 = vmatprep.subr.mxu0 0.0
    %464 = vmatpush1.msra.mxu0 0.0
    %465 = vmatprep.subr.mxu0 0.0
    %466 = vmatpush1.msra.mxu0 0.0
    %467 = vmatprep.subr.mxu0 0.0
    %468 = vmatpush1.msra.mxu0 0.0
    %469 = vmatprep.subr.mxu0 0.0
    %470 = vmatpush1.msra.mxu0 0.0
    %471 = vmatprep.subr.mxu0 0.0
    %472 = vmatpush1.msra.mxu0 0.0
    %473 = vmatprep.subr.mxu0 0.0
    %474 = vmatpush1.msra.mxu0 0.0
    %475 = vmatprep.subr.mxu0 0.0
    %476 = vmatpush1.msra.mxu0 0.0
    %477 = vmatprep.subr.mxu0 0.0
    %478 = vmatpush1.msra.mxu0 0.0
    %479 = vmatprep.subr.mxu0 0.0
    %480 = vmatpush1.msra.mxu0 0.0
    %481 = vmatprep.subr.mxu0 0.0
    %482 = vmatpush1.msra.mxu0 0.0
    %483 = vmatprep.subr.mxu0 0.0
    %484 = vmatpush1.msra.mxu0 0.0
    %485 = vmatprep.subr.mxu0 0.0
    %486 = vmatpush1.msra.mxu0 0.0
    %487 = vmatprep.mubr.f32.mxu0 0.0
    %488 = vmatmul.mubr.f32.gmra.mrb[0].mxu0 %v421
    %v489 = vpop.f32.mrb[0].mxu0
    %v490 = vadd.f32 0.0, %v489
    %v491 = vpop.f32.mrb[0].mxu0
    %492 = vdwg.mxu0
    %v493 = vadd.f32 %v280, %v490
    %v494 = vxor.u32 %v493, 2147483648
    %v495 = vmul.f32 %v494, 1.442695
    %v496 = vpow.pop %v495
    %v497 = vadd.f32 %v496, 1.0
    %v498 = vrcp.pop %v497
    %v499 = vmul.f32 1.0, %v498
    %v500 = vtanh.pop %v493
    %v501 = vmul.f32 %v499, %v409
    %503 = vrot.lane.b32.xlu0 %v500, 64
    %v504 = vpop.permute.xlu0 %503
    %v506 = vmul.f32 %v499, %v504
    %508 = vrot.lane.b32.xlu0 %v506, 32
    %v509 = vpop.permute.xlu0 %508
    %v511 = vadd.f32 %v501, %v509
    %v512 = vtanh.pop %v511
    %514 = vrot.lane.b32.xlu0 %v512, 64
    %v515 = vpop.permute.xlu0 %514
    %v517 = vmul.f32 %v499, %v515
    %519 = vrot.lane.b32.xlu0 %v517, 32
    %v520 = vpop.permute.xlu0 %519
    %s522 = scalar_lea.vmem [#allocation2], 8
    %523 = vst.msk [vmem:[%s522] sm:$0xff] %vm317, %v520
    %v524 = vsel %vm317, %v520, 0
    %526 = vmatprep.subr.mxu0 0.0
    %527 = vmatpush1.msra.mxu0 %v313
    %528 = vmatprep.subr.mxu0 0.0
    %529 = vmatpush1.msra.mxu0 %v314
    %530 = vmatprep.subr.mxu0 0.0
    %531 = vmatpush1.msra.mxu0 %v315
    %532 = vmatprep.subr.mxu0 0.0
    %533 = vmatpush1.msra.mxu0 %v316
    %534 = vmatprep.subr.mxu0 0.0
    %535 = vmatpush1.msra.mxu0 0.0
    %536 = vmatprep.subr.mxu0 0.0
    %537 = vmatpush1.msra.mxu0 0.0
    %538 = vmatprep.subr.mxu0 0.0
    %539 = vmatpush1.msra.mxu0 0.0
    %540 = vmatprep.subr.mxu0 0.0
    %541 = vmatpush1.msra.mxu0 0.0
    %542 = vmatprep.subr.mxu0 0.0
    %543 = vmatpush1.msra.mxu0 0.0
    %544 = vmatprep.subr.mxu0 0.0
    %545 = vmatpush1.msra.mxu0 0.0
    %546 = vmatprep.subr.mxu0 0.0
    %547 = vmatpush1.msra.mxu0 0.0
    %548 = vmatprep.subr.mxu0 0.0
    %549 = vmatpush1.msra.mxu0 0.0
    %550 = vmatprep.subr.mxu0 0.0
    %551 = vmatpush1.msra.mxu0 0.0
    %552 = vmatprep.subr.mxu0 0.0
    %553 = vmatpush1.msra.mxu0 0.0
    %554 = vmatprep.subr.mxu0 0.0
    %555 = vmatpush1.msra.mxu0 0.0
    %556 = vmatprep.subr.mxu0 0.0
    %557 = vmatpush1.msra.mxu0 0.0
    %558 = vmatprep.subr.mxu0 0.0
    %559 = vmatpush1.msra.mxu0 0.0
    %560 = vmatprep.subr.mxu0 0.0
    %561 = vmatpush1.msra.mxu0 0.0
    %562 = vmatprep.subr.mxu0 0.0
    %563 = vmatpush1.msra.mxu0 0.0
    %564 = vmatprep.subr.mxu0 0.0
    %565 = vmatpush1.msra.mxu0 0.0
    %566 = vmatprep.subr.mxu0 0.0
    %567 = vmatpush1.msra.mxu0 0.0
    %568 = vmatprep.subr.mxu0 0.0
    %569 = vmatpush1.msra.mxu0 0.0
    %570 = vmatprep.subr.mxu0 0.0
    %571 = vmatpush1.msra.mxu0 0.0
    %572 = vmatprep.subr.mxu0 0.0
    %573 = vmatpush1.msra.mxu0 0.0
    %574 = vmatprep.subr.mxu0 0.0
    %575 = vmatpush1.msra.mxu0 0.0
    %576 = vmatprep.subr.mxu0 0.0
    %577 = vmatpush1.msra.mxu0 0.0
    %578 = vmatprep.subr.mxu0 0.0
    %579 = vmatpush1.msra.mxu0 0.0
    %580 = vmatprep.subr.mxu0 0.0
    %581 = vmatpush1.msra.mxu0 0.0
    %582 = vmatprep.subr.mxu0 0.0
    %583 = vmatpush1.msra.mxu0 0.0
    %584 = vmatprep.subr.mxu0 0.0
    %585 = vmatpush1.msra.mxu0 0.0
    %586 = vmatprep.subr.mxu0 0.0
    %587 = vmatpush1.msra.mxu0 0.0
    %588 = vmatprep.subr.mxu0 0.0
    %589 = vmatpush1.msra.mxu0 0.0
    %590 = vmatprep.mubr.f32.mxu0 0.0
    %591 = vmatmul.mubr.f32.gmra.mrb[0].mxu0 %v524
    %v592 = vpop.f32.mrb[0].mxu0
    %v593 = vadd.f32 0.0, %v592
    %v594 = vpop.f32.mrb[0].mxu0
    %595 = vdwg.mxu0
    %v596 = vadd.f32 %v285, %v593
    %v597 = vxor.u32 %v596, 2147483648
    %v598 = vmul.f32 %v597, 1.442695
    %v599 = vpow.pop %v598
    %v600 = vadd.f32 %v599, 1.0
    %v601 = vrcp.pop %v600
    %v602 = vmul.f32 1.0, %v601
    %v603 = vtanh.pop %v596
    %v604 = vmul.f32 %v602, %v511
    %606 = vrot.lane.b32.xlu0 %v603, 64
    %v607 = vpop.permute.xlu0 %606
    %v609 = vmul.f32 %v602, %v607
    %611 = vrot.lane.b32.xlu0 %v609, 32
    %v612 = vpop.permute.xlu0 %611
    %v614 = vadd.f32 %v604, %v612
    %v615 = vtanh.pop %v614
    %617 = vrot.lane.b32.xlu0 %v615, 64
    %v618 = vpop.permute.xlu0 %617
    %v620 = vmul.f32 %v602, %v618
    %622 = vrot.lane.b32.xlu0 %v620, 32
    %v623 = vpop.permute.xlu0 %622
    %s625 = scalar_lea.vmem [#allocation2], 16
    %626 = vst.msk [vmem:[%s625] sm:$0xff] %vm317, %v623
    %v627 = vsel %vm317, %v623, 0
    %629 = vmatprep.subr.mxu0 0.0
    %630 = vmatpush1.msra.mxu0 %v313
    %631 = vmatprep.subr.mxu0 0.0
    %632 = vmatpush1.msra.mxu0 %v314
    %633 = vmatprep.subr.mxu0 0.0
    %634 = vmatpush1.msra.mxu0 %v315
    %635 = vmatprep.subr.mxu0 0.0
    %636 = vmatpush1.msra.mxu0 %v316
    %637 = vmatprep.subr.mxu0 0.0
    %638 = vmatpush1.msra.mxu0 0.0
    %639 = vmatprep.subr.mxu0 0.0
    %640 = vmatpush1.msra.mxu0 0.0
    %641 = vmatprep.subr.mxu0 0.0
    %642 = vmatpush1.msra.mxu0 0.0
    %643 = vmatprep.subr.mxu0 0.0
    %644 = vmatpush1.msra.mxu0 0.0
    %645 = vmatprep.subr.mxu0 0.0
    %646 = vmatpush1.msra.mxu0 0.0
    %647 = vmatprep.subr.mxu0 0.0
    %648 = vmatpush1.msra.mxu0 0.0
    %649 = vmatprep.subr.mxu0 0.0
    %650 = vmatpush1.msra.mxu0 0.0
    %651 = vmatprep.subr.mxu0 0.0
    %652 = vmatpush1.msra.mxu0 0.0
    %653 = vmatprep.subr.mxu0 0.0
    %654 = vmatpush1.msra.mxu0 0.0
    %655 = vmatprep.subr.mxu0 0.0
    %656 = vmatpush1.msra.mxu0 0.0
    %657 = vmatprep.subr.mxu0 0.0
    %658 = vmatpush1.msra.mxu0 0.0
    %659 = vmatprep.subr.mxu0 0.0
    %660 = vmatpush1.msra.mxu0 0.0
    %661 = vmatprep.subr.mxu0 0.0
    %662 = vmatpush1.msra.mxu0 0.0
    %663 = vmatprep.subr.mxu0 0.0
    %664 = vmatpush1.msra.mxu0 0.0
    %665 = vmatprep.subr.mxu0 0.0
    %666 = vmatpush1.msra.mxu0 0.0
    %667 = vmatprep.subr.mxu0 0.0
    %668 = vmatpush1.msra.mxu0 0.0
    %669 = vmatprep.subr.mxu0 0.0
    %670 = vmatpush1.msra.mxu0 0.0
    %671 = vmatprep.subr.mxu0 0.0
    %672 = vmatpush1.msra.mxu0 0.0
    %673 = vmatprep.subr.mxu0 0.0
    %674 = vmatpush1.msra.mxu0 0.0
    %675 = vmatprep.subr.mxu0 0.0
    %676 = vmatpush1.msra.mxu0 0.0
    %677 = vmatprep.subr.mxu0 0.0
    %678 = vmatpush1.msra.mxu0 0.0
    %679 = vmatprep.subr.mxu0 0.0
    %680 = vmatpush1.msra.mxu0 0.0
    %681 = vmatprep.subr.mxu0 0.0
    %682 = vmatpush1.msra.mxu0 0.0
    %683 = vmatprep.subr.mxu0 0.0
    %684 = vmatpush1.msra.mxu0 0.0
    %685 = vmatprep.subr.mxu0 0.0
    %686 = vmatpush1.msra.mxu0 0.0
    %687 = vmatprep.subr.mxu0 0.0
    %688 = vmatpush1.msra.mxu0 0.0
    %689 = vmatprep.subr.mxu0 0.0
    %690 = vmatpush1.msra.mxu0 0.0
    %691 = vmatprep.subr.mxu0 0.0
    %692 = vmatpush1.msra.mxu0 0.0
    %693 = vmatprep.mubr.f32.mxu0 0.0
    %694 = vmatmul.mubr.f32.gmra.mrb[0].mxu0 %v627
    %v695 = vpop.f32.mrb[0].mxu0
    %v696 = vadd.f32 0.0, %v695
    %v697 = vpop.f32.mrb[0].mxu0
    %698 = vdwg.mxu0
    %v699 = vadd.f32 %v290, %v696
    %v700 = vxor.u32 %v699, 2147483648
    %v701 = vmul.f32 %v700, 1.442695
    %v702 = vpow.pop %v701
    %v703 = vadd.f32 %v702, 1.0
    %v704 = vrcp.pop %v703
    %v705 = vmul.f32 1.0, %v704
    %v706 = vtanh.pop %v699
    %v707 = vmul.f32 %v705, %v614
    %709 = vrot.lane.b32.xlu0 %v706, 64
    %v710 = vpop.permute.xlu0 %709
    %v712 = vmul.f32 %v705, %v710
    %714 = vrot.lane.b32.xlu0 %v712, 32
    %v715 = vpop.permute.xlu0 %714
    %v717 = vadd.f32 %v707, %v715
    %v718 = vtanh.pop %v717
    %720 = vrot.lane.b32.xlu0 %v718, 64
    %v721 = vpop.permute.xlu0 %720
    %v723 = vmul.f32 %v705, %v721
    %725 = vrot.lane.b32.xlu0 %v723, 32
    %v726 = vpop.permute.xlu0 %725
    %s728 = scalar_lea.vmem [#allocation2], 24
    %729 = vst.msk [vmem:[%s728] sm:$0xff] %vm317, %v726
    %v730 = vsel %vm317, %v726, 0
    %732 = vmatprep.subr.mxu0 0.0
    %733 = vmatpush1.msra.mxu0 %v313
    %734 = vmatprep.subr.mxu0 0.0
    %735 = vmatpush1.msra.mxu0 %v314
    %736 = vmatprep.subr.mxu0 0.0
    %737 = vmatpush1.msra.mxu0 %v315
    %738 = vmatprep.subr.mxu0 0.0
    %739 = vmatpush1.msra.mxu0 %v316
    %740 = vmatprep.subr.mxu0 0.0
    %741 = vmatpush1.msra.mxu0 0.0
    %742 = vmatprep.subr.mxu0 0.0
    %743 = vmatpush1.msra.mxu0 0.0
    %744 = vmatprep.subr.mxu0 0.0
    %745 = vmatpush1.msra.mxu0 0.0
    %746 = vmatprep.subr.mxu0 0.0
    %747 = vmatpush1.msra.mxu0 0.0
    %748 = vmatprep.subr.mxu0 0.0
    %749 = vmatpush1.msra.mxu0 0.0
    %750 = vmatprep.subr.mxu0 0.0
    %751 = vmatpush1.msra.mxu0 0.0
    %752 = vmatprep.subr.mxu0 0.0
    %753 = vmatpush1.msra.mxu0 0.0
    %754 = vmatprep.subr.mxu0 0.0
    %755 = vmatpush1.msra.mxu0 0.0
    %756 = vmatprep.subr.mxu0 0.0
    %757 = vmatpush1.msra.mxu0 0.0
    %758 = vmatprep.subr.mxu0 0.0
    %759 = vmatpush1.msra.mxu0 0.0
    %760 = vmatprep.subr.mxu0 0.0
    %761 = vmatpush1.msra.mxu0 0.0
    %762 = vmatprep.subr.mxu0 0.0
    %763 = vmatpush1.msra.mxu0 0.0
    %764 = vmatprep.subr.mxu0 0.0
    %765 = vmatpush1.msra.mxu0 0.0
    %766 = vmatprep.subr.mxu0 0.0
    %767 = vmatpush1.msra.mxu0 0.0
    %768 = vmatprep.subr.mxu0 0.0
    %769 = vmatpush1.msra.mxu0 0.0
    %770 = vmatprep.subr.mxu0 0.0
    %771 = vmatpush1.msra.mxu0 0.0
    %772 = vmatprep.subr.mxu0 0.0
    %773 = vmatpush1.msra.mxu0 0.0
    %774 = vmatprep.subr.mxu0 0.0
    %775 = vmatpush1.msra.mxu0 0.0
    %776 = vmatprep.subr.mxu0 0.0
    %777 = vmatpush1.msra.mxu0 0.0
    %778 = vmatprep.subr.mxu0 0.0
    %779 = vmatpush1.msra.mxu0 0.0
    %780 = vmatprep.subr.mxu0 0.0
    %781 = vmatpush1.msra.mxu0 0.0
    %782 = vmatprep.subr.mxu0 0.0
    %783 = vmatpush1.msra.mxu0 0.0
    %784 = vmatprep.subr.mxu0 0.0
    %785 = vmatpush1.msra.mxu0 0.0
    %786 = vmatprep.subr.mxu0 0.0
    %787 = vmatpush1.msra.mxu0 0.0
    %788 = vmatprep.subr.mxu0 0.0
    %789 = vmatpush1.msra.mxu0 0.0
    %790 = vmatprep.subr.mxu0 0.0
    %791 = vmatpush1.msra.mxu0 0.0
    %792 = vmatprep.subr.mxu0 0.0
    %793 = vmatpush1.msra.mxu0 0.0
    %794 = vmatprep.subr.mxu0 0.0
    %795 = vmatpush1.msra.mxu0 0.0
    %796 = vmatprep.mubr.f32.mxu0 0.0
    %797 = vmatmul.mubr.f32.gmra.mrb[0].mxu0 %v730
    %v798 = vpop.f32.mrb[0].mxu0
    %v799 = vadd.f32 0.0, %v798
    %v800 = vpop.f32.mrb[0].mxu0
    %801 = vdwg.mxu0
    %v802 = vadd.f32 %v295, %v799
    %v803 = vxor.u32 %v802, 2147483648
    %v804 = vmul.f32 %v803, 1.442695
    %v805 = vpow.pop %v804
    %v806 = vadd.f32 %v805, 1.0
    %v807 = vrcp.pop %v806
    %v808 = vmul.f32 1.0, %v807
    %v809 = vtanh.pop %v802
    %v810 = vmul.f32 %v808, %v717
    %812 = vrot.lane.b32.xlu0 %v809, 64
    %v813 = vpop.permute.xlu0 %812
    %v815 = vmul.f32 %v808, %v813
    %817 = vrot.lane.b32.xlu0 %v815, 32
    %v818 = vpop.permute.xlu0 %817
    %v820 = vadd.f32 %v810, %v818
    %v821 = vtanh.pop %v820
    %823 = vrot.lane.b32.xlu0 %v821, 64
    %v824 = vpop.permute.xlu0 %823
    %v826 = vmul.f32 %v808, %v824
    %828 = vrot.lane.b32.xlu0 %v826, 32
    %v829 = vpop.permute.xlu0 %828
    %s831 = scalar_lea.vmem [#allocation2], 32
    %832 = vst.msk [vmem:[%s831] sm:$0xff] %vm317, %v829
    %v833 = vsel %vm317, %v829, 0
    %835 = vmatprep.subr.mxu0 0.0
    %836 = vmatpush1.msra.mxu0 %v313
    %837 = vmatprep.subr.mxu0 0.0
    %838 = vmatpush1.msra.mxu0 %v314
    %839 = vmatprep.subr.mxu0 0.0
    %840 = vmatpush1.msra.mxu0 %v315
    %841 = vmatprep.subr.mxu0 0.0
    %842 = vmatpush1.msra.mxu0 %v316
    %843 = vmatprep.subr.mxu0 0.0
    %844 = vmatpush1.msra.mxu0 0.0
    %845 = vmatprep.subr.mxu0 0.0
    %846 = vmatpush1.msra.mxu0 0.0
    %847 = vmatprep.subr.mxu0 0.0
    %848 = vmatpush1.msra.mxu0 0.0
    %849 = vmatprep.subr.mxu0 0.0
    %850 = vmatpush1.msra.mxu0 0.0
    %851 = vmatprep.subr.mxu0 0.0
    %852 = vmatpush1.msra.mxu0 0.0
    %853 = vmatprep.subr.mxu0 0.0
    %854 = vmatpush1.msra.mxu0 0.0
    %855 = vmatprep.subr.mxu0 0.0
    %856 = vmatpush1.msra.mxu0 0.0
    %857 = vmatprep.subr.mxu0 0.0
    %858 = vmatpush1.msra.mxu0 0.0
    %859 = vmatprep.subr.mxu0 0.0
    %860 = vmatpush1.msra.mxu0 0.0
    %861 = vmatprep.subr.mxu0 0.0
    %862 = vmatpush1.msra.mxu0 0.0
    %863 = vmatprep.subr.mxu0 0.0
    %864 = vmatpush1.msra.mxu0 0.0
    %865 = vmatprep.subr.mxu0 0.0
    %866 = vmatpush1.msra.mxu0 0.0
    %867 = vmatprep.subr.mxu0 0.0
    %868 = vmatpush1.msra.mxu0 0.0
    %869 = vmatprep.subr.mxu0 0.0
    %870 = vmatpush1.msra.mxu0 0.0
    %871 = vmatprep.subr.mxu0 0.0
    %872 = vmatpush1.msra.mxu0 0.0
    %873 = vmatprep.subr.mxu0 0.0
    %874 = vmatpush1.msra.mxu0 0.0
    %875 = vmatprep.subr.mxu0 0.0
    %876 = vmatpush1.msra.mxu0 0.0
    %877 = vmatprep.subr.mxu0 0.0
    %878 = vmatpush1.msra.mxu0 0.0
    %879 = vmatprep.subr.mxu0 0.0
    %880 = vmatpush1.msra.mxu0 0.0
    %881 = vmatprep.subr.mxu0 0.0
    %882 = vmatpush1.msra.mxu0 0.0
    %883 = vmatprep.subr.mxu0 0.0
    %884 = vmatpush1.msra.mxu0 0.0
    %885 = vmatprep.subr.mxu0 0.0
    %886 = vmatpush1.msra.mxu0 0.0
    %887 = vmatprep.subr.mxu0 0.0
    %888 = vmatpush1.msra.mxu0 0.0
    %889 = vmatprep.subr.mxu0 0.0
    %890 = vmatpush1.msra.mxu0 0.0
    %891 = vmatprep.subr.mxu0 0.0
    %892 = vmatpush1.msra.mxu0 0.0
    %893 = vmatprep.subr.mxu0 0.0
    %894 = vmatpush1.msra.mxu0 0.0
    %895 = vmatprep.subr.mxu0 0.0
    %896 = vmatpush1.msra.mxu0 0.0
    %897 = vmatprep.subr.mxu0 0.0
    %898 = vmatpush1.msra.mxu0 0.0
    %899 = vmatprep.mubr.f32.mxu0 0.0
    %900 = vmatmul.mubr.f32.gmra.mrb[0].mxu0 %v833
    %v901 = vpop.f32.mrb[0].mxu0
    %v902 = vadd.f32 0.0, %v901
    %v903 = vpop.f32.mrb[0].mxu0
    %904 = vdwg.mxu0
    %v905 = vadd.f32 %v300, %v902
    %v906 = vxor.u32 %v905, 2147483648
    %v907 = vmul.f32 %v906, 1.442695
    %v908 = vpow.pop %v907
    %v909 = vadd.f32 %v908, 1.0
    %v910 = vrcp.pop %v909
    %v911 = vmul.f32 1.0, %v910
    %v912 = vtanh.pop %v905
    %v913 = vmul.f32 %v911, %v820
    %915 = vrot.lane.b32.xlu0 %v912, 64
    %v916 = vpop.permute.xlu0 %915
    %v918 = vmul.f32 %v911, %v916
    %920 = vrot.lane.b32.xlu0 %v918, 32
    %v921 = vpop.permute.xlu0 %920
    %v923 = vadd.f32 %v913, %v921
    %v924 = vtanh.pop %v923
    %926 = vrot.lane.b32.xlu0 %v924, 64
    %v927 = vpop.permute.xlu0 %926
    %v929 = vmul.f32 %v911, %v927
    %931 = vrot.lane.b32.xlu0 %v929, 32
    %v932 = vpop.permute.xlu0 %931
    %s934 = scalar_lea.vmem [#allocation2], 40
    %935 = vst.msk [vmem:[%s934] sm:$0xff] %vm317, %v932
    %v936 = vsel %vm317, %v932, 0
    %938 = vmatprep.subr.mxu0 0.0
    %939 = vmatpush1.msra.mxu0 %v313
    %940 = vmatprep.subr.mxu0 0.0
    %941 = vmatpush1.msra.mxu0 %v314
    %942 = vmatprep.subr.mxu0 0.0
    %943 = vmatpush1.msra.mxu0 %v315
    %944 = vmatprep.subr.mxu0 0.0
    %945 = vmatpush1.msra.mxu0 %v316
    %946 = vmatprep.subr.mxu0 0.0
    %947 = vmatpush1.msra.mxu0 0.0
    %948 = vmatprep.subr.mxu0 0.0
    %949 = vmatpush1.msra.mxu0 0.0
    %950 = vmatprep.subr.mxu0 0.0
    %951 = vmatpush1.msra.mxu0 0.0
    %952 = vmatprep.subr.mxu0 0.0
    %953 = vmatpush1.msra.mxu0 0.0
    %954 = vmatprep.subr.mxu0 0.0
    %955 = vmatpush1.msra.mxu0 0.0
    %956 = vmatprep.subr.mxu0 0.0
    %957 = vmatpush1.msra.mxu0 0.0
    %958 = vmatprep.subr.mxu0 0.0
    %959 = vmatpush1.msra.mxu0 0.0
    %960 = vmatprep.subr.mxu0 0.0
    %961 = vmatpush1.msra.mxu0 0.0
    %962 = vmatprep.subr.mxu0 0.0
    %963 = vmatpush1.msra.mxu0 0.0
    %964 = vmatprep.subr.mxu0 0.0
    %965 = vmatpush1.msra.mxu0 0.0
    %966 = vmatprep.subr.mxu0 0.0
    %967 = vmatpush1.msra.mxu0 0.0
    %968 = vmatprep.subr.mxu0 0.0
    %969 = vmatpush1.msra.mxu0 0.0
    %970 = vmatprep.subr.mxu0 0.0
    %971 = vmatpush1.msra.mxu0 0.0
    %972 = vmatprep.subr.mxu0 0.0
    %973 = vmatpush1.msra.mxu0 0.0
    %974 = vmatprep.subr.mxu0 0.0
    %975 = vmatpush1.msra.mxu0 0.0
    %976 = vmatprep.subr.mxu0 0.0
    %977 = vmatpush1.msra.mxu0 0.0
    %978 = vmatprep.subr.mxu0 0.0
    %979 = vmatpush1.msra.mxu0 0.0
    %980 = vmatprep.subr.mxu0 0.0
    %981 = vmatpush1.msra.mxu0 0.0
    %982 = vmatprep.subr.mxu0 0.0
    %983 = vmatpush1.msra.mxu0 0.0
    %984 = vmatprep.subr.mxu0 0.0
    %985 = vmatpush1.msra.mxu0 0.0
    %986 = vmatprep.subr.mxu0 0.0
    %987 = vmatpush1.msra.mxu0 0.0
    %988 = vmatprep.subr.mxu0 0.0
    %989 = vmatpush1.msra.mxu0 0.0
    %990 = vmatprep.subr.mxu0 0.0
    %991 = vmatpush1.msra.mxu0 0.0
    %992 = vmatprep.subr.mxu0 0.0
    %993 = vmatpush1.msra.mxu0 0.0
    %994 = vmatprep.subr.mxu0 0.0
    %995 = vmatpush1.msra.mxu0 0.0
    %996 = vmatprep.subr.mxu0 0.0
    %997 = vmatpush1.msra.mxu0 0.0
    %998 = vmatprep.subr.mxu0 0.0
    %999 = vmatpush1.msra.mxu0 0.0
    %1000 = vmatprep.subr.mxu0 0.0
    %1001 = vmatpush1.msra.mxu0 0.0
    %1002 = vmatprep.mubr.f32.mxu0 0.0
    %1003 = vmatmul.mubr.f32.gmra.mrb[0].mxu0 %v936
    %v1004 = vpop.f32.mrb[0].mxu0
    %v1005 = vadd.f32 0.0, %v1004
    %v1006 = vpop.f32.mrb[0].mxu0
    %1007 = vdwg.mxu0
    %v1008 = vadd.f32 %v305, %v1005
    %v1009 = vxor.u32 %v1008, 2147483648
    %v1010 = vmul.f32 %v1009, 1.442695
    %v1011 = vpow.pop %v1010
    %v1012 = vadd.f32 %v1011, 1.0
    %v1013 = vrcp.pop %v1012
    %v1014 = vmul.f32 1.0, %v1013
    %v1015 = vtanh.pop %v1008
    %v1016 = vmul.f32 %v1014, %v923
    %1018 = vrot.lane.b32.xlu0 %v1015, 64
    %v1019 = vpop.permute.xlu0 %1018
    %v1021 = vmul.f32 %v1014, %v1019
    %1023 = vrot.lane.b32.xlu0 %v1021, 32
    %v1024 = vpop.permute.xlu0 %1023
    %v1026 = vadd.f32 %v1016, %v1024
    %v1027 = vtanh.pop %v1026
    %1029 = vrot.lane.b32.xlu0 %v1027, 64
    %v1030 = vpop.permute.xlu0 %1029
    %v1032 = vmul.f32 %v1014, %v1030
    %1034 = vrot.lane.b32.xlu0 %v1032, 32
    %v1035 = vpop.permute.xlu0 %1034
    %s1037 = scalar_lea.vmem [#allocation2], 48
    %1038 = vst.msk [vmem:[%s1037] sm:$0xff] %vm317, %v1035
    %v1039 = vsel %vm317, %v1035, 0
    %1041 = vmatprep.subr.mxu0 0.0
    %1042 = vmatpush1.msra.mxu0 %v313
    %1043 = vmatprep.subr.mxu0 0.0
    %1044 = vmatpush1.msra.mxu0 %v314
    %1045 = vmatprep.subr.mxu0 0.0
    %1046 = vmatpush1.msra.mxu0 %v315
    %1047 = vmatprep.subr.mxu0 0.0
    %1048 = vmatpush1.msra.mxu0 %v316
    %1049 = vmatprep.subr.mxu0 0.0
    %1050 = vmatpush1.msra.mxu0 0.0
    %1051 = vmatprep.subr.mxu0 0.0
    %1052 = vmatpush1.msra.mxu0 0.0
    %1053 = vmatprep.subr.mxu0 0.0
    %1054 = vmatpush1.msra.mxu0 0.0
    %1055 = vmatprep.subr.mxu0 0.0
    %1056 = vmatpush1.msra.mxu0 0.0
    %1057 = vmatprep.subr.mxu0 0.0
    %1058 = vmatpush1.msra.mxu0 0.0
    %1059 = vmatprep.subr.mxu0 0.0
    %1060 = vmatpush1.msra.mxu0 0.0
    %1061 = vmatprep.subr.mxu0 0.0
    %1062 = vmatpush1.msra.mxu0 0.0
    %1063 = vmatprep.subr.mxu0 0.0
    %1064 = vmatpush1.msra.mxu0 0.0
    %1065 = vmatprep.subr.mxu0 0.0
    %1066 = vmatpush1.msra.mxu0 0.0
    %1067 = vmatprep.subr.mxu0 0.0
    %1068 = vmatpush1.msra.mxu0 0.0
    %1069 = vmatprep.subr.mxu0 0.0
    %1070 = vmatpush1.msra.mxu0 0.0
    %1071 = vmatprep.subr.mxu0 0.0
    %1072 = vmatpush1.msra.mxu0 0.0
    %1073 = vmatprep.subr.mxu0 0.0
    %1074 = vmatpush1.msra.mxu0 0.0
    %1075 = vmatprep.subr.mxu0 0.0
    %1076 = vmatpush1.msra.mxu0 0.0
    %1077 = vmatprep.subr.mxu0 0.0
    %1078 = vmatpush1.msra.mxu0 0.0
    %1079 = vmatprep.subr.mxu0 0.0
    %1080 = vmatpush1.msra.mxu0 0.0
    %1081 = vmatprep.subr.mxu0 0.0
    %1082 = vmatpush1.msra.mxu0 0.0
    %1083 = vmatprep.subr.mxu0 0.0
    %1084 = vmatpush1.msra.mxu0 0.0
    %1085 = vmatprep.subr.mxu0 0.0
    %1086 = vmatpush1.msra.mxu0 0.0
    %1087 = vmatprep.subr.mxu0 0.0
    %1088 = vmatpush1.msra.mxu0 0.0
    %1089 = vmatprep.subr.mxu0 0.0
    %1090 = vmatpush1.msra.mxu0 0.0
    %1091 = vmatprep.subr.mxu0 0.0
    %1092 = vmatpush1.msra.mxu0 0.0
    %1093 = vmatprep.subr.mxu0 0.0
    %1094 = vmatpush1.msra.mxu0 0.0
    %1095 = vmatprep.subr.mxu0 0.0
    %1096 = vmatpush1.msra.mxu0 0.0
    %1097 = vmatprep.subr.mxu0 0.0
    %1098 = vmatpush1.msra.mxu0 0.0
    %1099 = vmatprep.subr.mxu0 0.0
    %1100 = vmatpush1.msra.mxu0 0.0
    %1101 = vmatprep.subr.mxu0 0.0
    %1102 = vmatpush1.msra.mxu0 0.0
    %1103 = vmatprep.subr.mxu0 0.0
    %1104 = vmatpush1.msra.mxu0 0.0
    %1105 = vmatprep.mubr.f32.mxu0 0.0
    %1106 = vmatmul.mubr.f32.gmra.mrb[0].mxu0 %v1039
    %v1107 = vpop.f32.mrb[0].mxu0
    %v1108 = vadd.f32 0.0, %v1107
    %v1109 = vpop.f32.mrb[0].mxu0
    %1110 = vdwg.mxu0
    %v1111 = vadd.f32 %v310, %v1108
    %v1112 = vxor.u32 %v1111, 2147483648
    %v1113 = vmul.f32 %v1112, 1.442695
    %v1114 = vpow.pop %v1113
    %v1115 = vadd.f32 %v1114, 1.0
    %v1116 = vrcp.pop %v1115
    %v1117 = vmul.f32 1.0, %v1116
    %v1118 = vtanh.pop %v1111
    %v1119 = vmul.f32 %v1117, %v1026
    %1121 = vrot.lane.b32.xlu0 %v1118, 64
    %v1122 = vpop.permute.xlu0 %1121
    %v1124 = vmul.f32 %v1117, %v1122
    %1126 = vrot.lane.b32.xlu0 %v1124, 32
    %v1127 = vpop.permute.xlu0 %1126
    %v1129 = vadd.f32 %v1119, %v1127
    %v1130 = vtanh.pop %v1129
    %1132 = vrot.lane.b32.xlu0 %v1130, 64
    %v1133 = vpop.permute.xlu0 %1132
    %v1135 = vmul.f32 %v1117, %v1133
    %1137 = vrot.lane.b32.xlu0 %v1135, 32
    %v1138 = vpop.permute.xlu0 %1137
    %s1140 = scalar_lea.vmem [#allocation2], 56
    %1141 = vst.msk [vmem:[%s1140] sm:$0xff] %vm317, %v1138
    // Predicated region
    $region26: #{tpu_custom_call.1} parent=1 // pred_check
      _
    $region27: #{tpu_custom_call.1} parent=1 // pred_check_branch
      %1143 = sbr.rel (0) target = $region29
    $region28: #{tpu_custom_call.1} parent=1 // pred_region
      %s1145 = ssub.s32 1024, 1024
      %1146 = vsyncadd [#allocation3], %s1145
      %s1147 = sshll.u32 [#allocation2], 4
      %s1148 = int_to_ptr.vmem [resolvable:$true] %s1147
      %1153 = dma.vmem_to_hbm [thread:$0]  %s1148, 1024, %s6, [#allocation3], 128, 128, 8
    $region29: #{tpu_custom_call.1} parent=1 // pred_fallthru
      _
    // Predicated region
    $region30: #{tpu_custom_call.1} parent=1 // pred_check
      _
    $region31: #{tpu_custom_call.1} parent=1 // pred_check_branch
      %1155 = sbr.rel (0) target = $region33
    $region32: #{tpu_custom_call.1} parent=1 // pred_region
      %1156 = dma.done [#allocation3], 1024
    $region33: #{tpu_custom_call.1} parent=1 // pred_fallthru
      _
    %1157 = vsyncpa [#allocation3], 1

</llo_original>
